<compile_context>
chip_gen: v7x
topology: tpu7x:2x2x1
jax: 0.10.0
libtpu: 0.0.40
codegen_flags: <defaults>
</compile_context>

<pallas_src>
import jax
import jax.numpy as jnp
from jax.experimental import pallas as pl
from jax.experimental.pallas import tpu as pltpu

_SMALL_BYPASS_BYTES = 1 << 20   # <= 1 MiB total: plain jnp.concatenate is better
_MIN_RUN_BYTES = 512            # per-batch contiguous run below this: avoid strided DMA


def _concat_dma_kernel(c1: int, c2: int):
    """Grid-free kernel: both HBM->HBM DMAs issued concurrently on one core."""

    def kernel(x_ref, y_ref, o_ref, sem):
        cp_x = pltpu.make_async_copy(x_ref, o_ref.at[:, pl.ds(0, c1), :, :], sem.at[0])
        cp_y = pltpu.make_async_copy(y_ref, o_ref.at[:, pl.ds(c1, c2), :, :], sem.at[1])
        cp_x.start()
        cp_y.start()
        cp_x.wait()
        cp_y.wait()

    return kernel


def _concat_dma_kernel_split(c1: int, c2: int):
    """grid=(2,) kernel: program 0 copies x, program 1 copies y (one per core
    when the 'parallel' grid axis is sharded across TensorCores)."""

    def kernel(x_ref, y_ref, o_ref, sem):
        pid = pl.program_id(0)

        @pl.when(pid == 0)
        def _():
            cp = pltpu.make_async_copy(
                x_ref, o_ref.at[:, pl.ds(0, c1), :, :], sem.at[0]
            )
            cp.start()
            cp.wait()

        @pl.when(pid == 1)
        def _():
            cp = pltpu.make_async_copy(
                y_ref, o_ref.at[:, pl.ds(c1, c2), :, :], sem.at[1]
            )
            cp.start()
            cp.wait()

    return kernel


def _cores_per_device() -> int:
    """Best-effort detection of chips exposing 2 TensorCores per JAX device."""
    try:
        kind = jax.devices()[0].device_kind.lower()
    except Exception:
        return 1
    if ("v7" in kind) or ("7x" in kind) or ("v5p" in kind) or ("v4" in kind):
        return 2
    return 1


def cat_channels(x: jax.Array, y: jax.Array, *, use_kernel: bool | None = None) -> jax.Array:
    """torch.cat([x, y], dim=1); the subsequent single-tensor cat is identity."""
    n, c1, h, w = x.shape
    n2, c2, h2, w2 = y.shape
    assert (n, h, w) == (n2, h2, w2), "non-channel dims must match"
    assert x.dtype == y.dtype
    c_out = c1 + c2
    itemsize = jnp.dtype(x.dtype).itemsize
    total_bytes = (x.size + y.size) * itemsize
    min_run_bytes = min(c1, c2) * h * w * itemsize

    if use_kernel is None:
        # Bypass: tiny tensors (fixed kernel/DMA overhead dominates, and XLA can
        # fuse the concat into the consumer) or pathologically small contiguous
        # runs (strided HBM->HBM DMA throughput collapses below the granule).
        use_kernel = total_bytes > _SMALL_BYPASS_BYTES and min_run_bytes >= _MIN_RUN_BYTES

    if not use_kernel:
        return jnp.concatenate([x, y], axis=1)

    cost = pl.CostEstimate(
        flops=0,
        transcendentals=0,
        bytes_accessed=2 * int(total_bytes),  # read x,y + write both output slices
    )
    common = dict(
        out_shape=jax.ShapeDtypeStruct((n, c_out, h, w), x.dtype),
        in_specs=[
            pl.BlockSpec(memory_space=pl.ANY),
            pl.BlockSpec(memory_space=pl.ANY),
        ],
        out_specs=pl.BlockSpec(memory_space=pl.ANY),
        scratch_shapes=[pltpu.SemaphoreType.DMA((2,))],
        cost_estimate=cost,
    )

    if _cores_per_device() > 1:
        # v7x / megacore: shard the two copies across the TensorCores.
        return pl.pallas_call(
            _concat_dma_kernel_split(c1, c2),
            grid=(2,),
            compiler_params=pltpu.CompilerParams(
                dimension_semantics=("parallel",)
            ),
            **common,
        )(x, y)

    # Single-TC chips (v5e / v6e): grid-free, both DMAs in flight at once.
    return pl.pallas_call(_concat_dma_kernel(c1, c2), **common)(x, y)


# TODO(synk): for small-W NCHW activations (W % 128 != 0) the padded (8,128)
# HBM tiling wastes bandwidth on both paths; keeping such activations stored
# pre-flattened as (N, C*H*W) in the surrounding model avoids that (wrapper /
# model-level layout change, outside this kernel).


if __name__ == "__main__":
    key = jax.random.PRNGKey(0)
    kx, ky, kx2, ky2 = jax.random.split(key, 4)

    # 1) Small shape consistent with the module's (N, C, H, W) forward.
    #    Takes the jnp.concatenate bypass (kernel overhead would dominate).
    x_small = jax.random.normal(kx, (2, 4, 16, 16), dtype=jnp.float32)
    y_small = jax.random.normal(ky, (2, 4, 16, 16), dtype=jnp.float32)
    out_small = jax.block_until_ready(cat_channels(x_small, y_small))
    ref_small = jnp.concatenate([x_small, y_small], axis=1)
    assert out_small.shape == (2, 8, 16, 16)
    assert jnp.array_equal(out_small, ref_small), "mismatch vs reference (bypass path)"

    # 2) Larger lane-dense shape that exercises the Pallas HBM->HBM DMA kernel.
    x_big = jax.random.normal(kx2, (2, 32, 16, 128), dtype=jnp.float32)  # 1.0 MiB
    y_big = jax.random.normal(ky2, (2, 16, 16, 128), dtype=jnp.float32)  # 0.5 MiB
    out_big = jax.block_until_ready(cat_channels(x_big, y_big, use_kernel=True))
    ref_big = jnp.concatenate([x_big, y_big], axis=1)
    assert out_big.shape == (2, 48, 16, 128)
    assert jnp.array_equal(out_big, ref_big), "mismatch vs reference (kernel path)"

    print("KERNEL_OK")
</pallas_src>

<mosaic_0001>
module attributes {stable_mosaic.version = 11 : i64} {
  func.func @kernel(%arg0: memref<2x32x16x128xf32, #tpu.memory_space<any>>, %arg1: memref<2x16x16x128xf32, #tpu.memory_space<any>>, %arg2: memref<2x48x16x128xf32, #tpu.memory_space<any>>, %arg3: memref<2x!tpu.dma_semaphore, #tpu.memory_space<semaphore_mem>>) attributes {dimension_semantics = [], scalar_prefetch = 0 : i64, scratch_operands = 1 : i64, tpu.core_type = #tpu.core_type<tc>} {
    %c0_i32 = arith.constant 0 : i32
    %c0_i32_0 = arith.constant 0 : i32
    %c0_i32_1 = arith.constant 0 : i32
    %c0_i32_2 = arith.constant 0 : i32
    %c0_i32_3 = arith.constant 0 : i32
    %0 = tpu.memref_slice %arg2[%c0_i32_0, %c0_i32_1, %c0_i32_2, %c0_i32_3] : memref<2x48x16x128xf32, #tpu.memory_space<any>> -> memref<2x32x16x128xf32, #tpu.memory_space<any>>
    %1 = tpu.memref_slice %arg3[%c0_i32] : memref<2x!tpu.dma_semaphore, #tpu.memory_space<semaphore_mem>> -> memref<1x!tpu.dma_semaphore, #tpu.memory_space<semaphore_mem>>
    %2 = tpu.memref_squeeze %1 : memref<1x!tpu.dma_semaphore, #tpu.memory_space<semaphore_mem>> -> memref<!tpu.dma_semaphore, #tpu.memory_space<semaphore_mem>>
    tpu.enqueue_dma source(%arg0 : memref<2x32x16x128xf32, #tpu.memory_space<any>>) target(%0 : memref<2x32x16x128xf32, #tpu.memory_space<any>>) target_semaphore(%2 : memref<!tpu.dma_semaphore, #tpu.memory_space<semaphore_mem>>)
    %c1_i32 = arith.constant 1 : i32
    %c0_i32_4 = arith.constant 0 : i32
    %c32_i32 = arith.constant 32 : i32
    %c0_i32_5 = arith.constant 0 : i32
    %c0_i32_6 = arith.constant 0 : i32
    %3 = tpu.memref_slice %arg2[%c0_i32_4, %c32_i32, %c0_i32_5, %c0_i32_6] : memref<2x48x16x128xf32, #tpu.memory_space<any>> -> memref<2x16x16x128xf32, #tpu.memory_space<any>>
    %4 = tpu.memref_slice %arg3[%c1_i32] : memref<2x!tpu.dma_semaphore, #tpu.memory_space<semaphore_mem>> -> memref<1x!tpu.dma_semaphore, #tpu.memory_space<semaphore_mem>>
    %5 = tpu.memref_squeeze %4 : memref<1x!tpu.dma_semaphore, #tpu.memory_space<semaphore_mem>> -> memref<!tpu.dma_semaphore, #tpu.memory_space<semaphore_mem>>
    tpu.enqueue_dma source(%arg1 : memref<2x16x16x128xf32, #tpu.memory_space<any>>) target(%3 : memref<2x16x16x128xf32, #tpu.memory_space<any>>) target_semaphore(%5 : memref<!tpu.dma_semaphore, #tpu.memory_space<semaphore_mem>>)
    %c0_i32_7 = arith.constant 0 : i32
    %c0_i32_8 = arith.constant 0 : i32
    %c0_i32_9 = arith.constant 0 : i32
    %c0_i32_10 = arith.constant 0 : i32
    %c0_i32_11 = arith.constant 0 : i32
    %6 = tpu.memref_slice %arg2[%c0_i32_8, %c0_i32_9, %c0_i32_10, %c0_i32_11] : memref<2x48x16x128xf32, #tpu.memory_space<any>> -> memref<2x32x16x128xf32, #tpu.memory_space<any>>
    %7 = tpu.memref_slice %arg3[%c0_i32_7] : memref<2x!tpu.dma_semaphore, #tpu.memory_space<semaphore_mem>> -> memref<1x!tpu.dma_semaphore, #tpu.memory_space<semaphore_mem>>
    %8 = tpu.memref_squeeze %7 : memref<1x!tpu.dma_semaphore, #tpu.memory_space<semaphore_mem>> -> memref<!tpu.dma_semaphore, #tpu.memory_space<semaphore_mem>>
    tpu.wait_dma2 semaphore(%8 : memref<!tpu.dma_semaphore, #tpu.memory_space<semaphore_mem>>) src(%arg0 : memref<2x32x16x128xf32, #tpu.memory_space<any>>) dst(%6 : memref<2x32x16x128xf32, #tpu.memory_space<any>>)
    %c1_i32_12 = arith.constant 1 : i32
    %c0_i32_13 = arith.constant 0 : i32
    %c32_i32_14 = arith.constant 32 : i32
    %c0_i32_15 = arith.constant 0 : i32
    %c0_i32_16 = arith.constant 0 : i32
    %9 = tpu.memref_slice %arg2[%c0_i32_13, %c32_i32_14, %c0_i32_15, %c0_i32_16] : memref<2x48x16x128xf32, #tpu.memory_space<any>> -> memref<2x16x16x128xf32, #tpu.memory_space<any>>
    %10 = tpu.memref_slice %arg3[%c1_i32_12] : memref<2x!tpu.dma_semaphore, #tpu.memory_space<semaphore_mem>> -> memref<1x!tpu.dma_semaphore, #tpu.memory_space<semaphore_mem>>
    %11 = tpu.memref_squeeze %10 : memref<1x!tpu.dma_semaphore, #tpu.memory_space<semaphore_mem>> -> memref<!tpu.dma_semaphore, #tpu.memory_space<semaphore_mem>>
    tpu.wait_dma2 semaphore(%11 : memref<!tpu.dma_semaphore, #tpu.memory_space<semaphore_mem>>) src(%arg1 : memref<2x16x16x128xf32, #tpu.memory_space<any>>) dst(%9 : memref<2x16x16x128xf32, #tpu.memory_space<any>>)
    return
  }
}

</mosaic_0001>

<llo_original>
// kernel: tpu_custom_call.1
$region0: #{tpu_custom_call.1}
  #allocation0 [shape = 'u32[]', space=smem, size = 0x4, offset = 0x4, fixed_abs, tag = 'smem constant byte address 0x4 - core index']
  #allocation1 [shape = 'u32[144,128]{1,0:T(1,128)}', space=vmem, size = 0x12000, scoped, tag = 'internal scratch']
  #allocation2 [shape = 's32[2]{0}', space=sflag, size = 0x8, scoped, tag = 'scratch operand']
  #allocation3 [shape = 's32[]', space=sflag, size = 0x4, offset = 0, fixed_abs, tag = 'sflag constant byte address 0x0 - dummy sync flag']
  #allocation5 [shape = 's32[]', space=sflag, size = 0x4, offset = 0, fixed_abs, tag = 'sflag constant byte address 0x0 - dummy sync flag']
  %s0 = inlined_call_operand.hbm [shape: f32[2,32,16,128], index: 0, kind: input, shape index: {}]
  %s1 = inlined_call_operand.hbm [shape: f32[2,16,16,128], index: 1, kind: input, shape index: {}]
  %s2 = inlined_call_operand.hbm [shape: f32[2,48,16,128], index: 2, kind: output, shape index: {}]
  %s3 = sld [smem:[#allocation0]]
  $region2: #{tpu_custom_call.1} parent=0
    _
  %s5 = ssub.s32 1, %s3
  %s6 = scalar_select 0, %s5, %s3
  $region1: #{tpu_custom_call.1} parent=0
    #allocation4 [shape = 'u32[3]{0}', space=smem, size = 0xc, scoped, tag = 'DMA stride descriptor']
    #allocation6 [shape = 'u32[3]{0}', space=smem, size = 0xc, scoped, tag = 'DMA stride descriptor']
    %s8 = sshll.u32 1, 14
    %s9 = sxor.u32 4294967295, %s8
    %s12 = sshll.u32 3, 24
    %s13 = sxor.u32 4294967295, %s12
    %s14 = sand.u32 0, %s13
    %s16 = sor.u32 %s14, 0
    %19 = sst [smem:[#allocation4]] 8192
    %s20 = scalar_lea.smem [#allocation4], 1
    %21 = sst [smem:[%s20]] 12288
    %s22 = scalar_lea.smem [#allocation4], 2
    %23 = sst [smem:[%s22]] 512
    %25 = dma.general %s0, 16384, %s2, [#allocation2], [#allocation3], [#allocation4], %s16, 0
    %s26 = scalar_lea.hbm %s2, 8192
    %s27 = scalar_lea.sflag [#allocation2], 1
    %s29 = sshll.u32 1, 14
    %s30 = sxor.u32 4294967295, %s29
    %s33 = sshll.u32 3, 24
    %s34 = sxor.u32 4294967295, %s33
    %s35 = sand.u32 0, %s34
    %s37 = sor.u32 %s35, 0
    %40 = sst [smem:[#allocation6]] 4096
    %s41 = scalar_lea.smem [#allocation6], 1
    %42 = sst [smem:[%s41]] 12288
    %s43 = scalar_lea.smem [#allocation6], 2
    %44 = sst [smem:[%s43]] 256
    %46 = dma.general %s1, 8192, %s26, %s27, [#allocation5], [#allocation6], %s37, 0
    %s47 = smul.u32 2, 32
    %s48 = smul.u32 %s47, 16
    %s49 = smul.u32 %s48, 1
    %s50 = sshll.u32 %s49, 4
    %51 = dma.done [#allocation2], %s50
    %s52 = smul.u32 2, 16
    %s53 = smul.u32 %s52, 16
    %s54 = smul.u32 %s53, 1
    %s55 = sshll.u32 %s54, 4
    %56 = dma.done %s27, %s55
  %57 = vsyncmov [#allocation2]
  %s58 = vpop.sfrf %57
  %p59 = scmp.eq.s32.totalorder %s58, 0
  %p60 = pneg %p59
  %62 = shalt.err (%p60)
  %s63 = scalar_lea.sflag [#allocation2], 1
  %64 = vsyncmov %s63
  %s65 = vpop.sfrf %64
  %p66 = scmp.eq.s32.totalorder %s65, 0
  %p67 = pneg %p66
  %69 = shalt.err (%p67)

</llo_original>
